<compile_context>
chip_gen: v5e
topology: v5e:2x2
jax: 0.10.0
libtpu: 0.0.40
codegen_flags: <defaults>
</compile_context>

<pallas_src>
import jax
import jax.numpy as jnp
from jax.experimental import pallas as pl
from jax.experimental.pallas import tpu as pltpu


def _cse_kernel(x_ref, w1t_ref, b1_ref, w2t_ref, b2_ref, o_ref):
    # x_ref / o_ref block: (B, C*HW) in the input's native dtype.
    # w1t: (C, Cr)  squeeze conv weight, transposed; b1: (1, Cr)
    # w2t: (Cr, C)  expand  conv weight, transposed; b2: (1, C)
    C, Cr = w1t_ref.shape
    HW = x_ref.shape[1] // C

    w1t = w1t_ref[...]
    b1 = b1_ref[...]
    w2t = w2t_ref[...]
    b2 = b2_ref[...]

    # AdaptiveAvgPool2d(1) fused with the squeeze 1x1 conv:
    #   h[b, r] = b1[r] + sum_c mean_c[b] * w1[r, c]
    # Per-channel slices are static, 128-aligned lane ranges of the slab.
    h = b1                                                           # (1, Cr) -> broadcasts
    for c in range(C):
        xc = x_ref[:, c * HW:(c + 1) * HW]                           # (B, HW), native dtype
        mc = jnp.mean(xc, axis=-1, keepdims=True, dtype=jnp.float32)  # (B, 1) f32 accumulation
        h = h + mc * w1t[c:c + 1, :]                                 # (B,1)*(1,Cr) -> (B,Cr)
    h = jnp.clip(h, 0.0, 6.0)                                        # ReLU6

    # Expand 1x1 conv + sigmoid: g[b, c] = sigmoid(b2[c] + sum_r h[b, r] * w2[c, r])
    z = b2                                                           # (1, C) -> broadcasts
    for r in range(Cr):
        z = z + h[:, r:r + 1] * w2t[r:r + 1, :]                      # (B,1)*(1,C) -> (B,C)
    g = jax.nn.sigmoid(z)                                            # (B, C) f32

    # Channel gate, broadcast over the lane-dense spatial dim, stored in native dtype.
    for c in range(C):
        xc = x_ref[:, c * HW:(c + 1) * HW]
        o_ref[:, c * HW:(c + 1) * HW] = xc * g[:, c:c + 1].astype(xc.dtype)


def _vmem_capacity_bytes():
    """Physical VMEM of the attached TPU; conservative v7x (64 MiB) fallback."""
    try:
        cap = getattr(pltpu.get_tpu_info(), "vmem_capacity_bytes", None)
        if cap:
            return int(cap)
    except Exception:
        pass
    return 64 * 1024 * 1024


def _pick_block_rows(n_rows, row_bytes, itemsize, per_buffer_budget):
    """Largest sublane-aligned row-block whose buffer fits the per-buffer budget.

    Returns n_rows itself (one full block, always a legal block shape) when the
    whole array fits; otherwise a multiple of the sublane packing, which makes
    grid = cdiv(n_rows, block_rows) >= 2 so both v7x TensorCores get work."""
    align = max(8, 32 // max(1, itemsize))        # 8 rows (f32) / 16 (bf16) / 32 (int8)
    target = (per_buffer_budget // max(1, row_bytes)) // align * align
    target = max(align, target)
    return n_rows if n_rows <= target else target


def cse_forward(x_nchw, w1, b1, w2, b2, *, block_rows=None):
    """cSE forward.  x_nchw: (N, C, H, W); w1: (Cr, C); b1: (Cr,); w2: (C, Cr); b2: (C,)."""
    N, C, H, W = x_nchw.shape
    Cr = w1.shape[0]
    HW = H * W
    CHW = C * HW
    # Free, contiguous flatten: lane dim = C*HW (1024 here, multiple of 128).
    # TODO(synk): if HW % 128 != 0 the per-channel lane slices are unaligned (still
    # correct, just slower); pad HW to a 128-multiple and rescale the mean if needed.
    x2 = x_nchw.reshape(N, CHW)

    itemsize = jnp.dtype(x_nchw.dtype).itemsize
    row_bytes = CHW * itemsize

    # Per-generation VMEM plan: 2x double-buffered (input + output) blocks.
    # v7x: 64 MiB physical -> ~6 MiB buffers; v5e/v6e: 128 MiB -> ~12 MiB buffers.
    vmem_cap = _vmem_capacity_bytes()
    per_buffer_budget = max(1 << 20, (vmem_cap * 3) // 32)
    if block_rows is None:
        block_rows = _pick_block_rows(N, row_bytes, itemsize, per_buffer_budget)
    num_blocks = pl.cdiv(N, block_rows)

    block_bytes = block_rows * row_bytes
    # in/out double buffers + slack for weights, spills and compiler-internal scratch.
    vmem_limit = 4 * block_bytes + (16 << 20)
    vmem_limit = int(min(max(vmem_limit, 16 << 20), vmem_cap - (8 << 20)))

    # 1x1 conv parameters as small f32 matrices / row vectors (tiny; loaded once).
    # TODO(synk): could be packed into a single padded f32 slab to save 3 tiny
    # BlockSpec pipelines; negligible for this HBM-bound kernel.
    w1t = jnp.asarray(w1, jnp.float32).reshape(Cr, C).T              # (C, Cr)
    b1r = jnp.asarray(b1, jnp.float32).reshape(1, Cr)
    w2t = jnp.asarray(w2, jnp.float32).reshape(C, Cr).T              # (Cr, C)
    b2r = jnp.asarray(b2, jnp.float32).reshape(1, C)

    out2 = pl.pallas_call(
        _cse_kernel,
        out_shape=jax.ShapeDtypeStruct((N, CHW), x_nchw.dtype),
        grid_spec=pltpu.PrefetchScalarGridSpec(
            num_scalar_prefetch=0,
            grid=(num_blocks,),
            in_specs=[
                pl.BlockSpec((block_rows, CHW), lambda i: (i, 0)),
                pl.BlockSpec((C, Cr), lambda i: (0, 0)),
                pl.BlockSpec((1, Cr), lambda i: (0, 0)),
                pl.BlockSpec((Cr, C), lambda i: (0, 0)),
                pl.BlockSpec((1, C), lambda i: (0, 0)),
            ],
            out_specs=pl.BlockSpec((block_rows, CHW), lambda i: (i, 0)),
        ),
        compiler_params=pltpu.CompilerParams(
            dimension_semantics=("parallel",),
            vmem_limit_bytes=vmem_limit,
        ),
    )(x2, w1t, b1r, w2t, b2r)
    return out2.reshape(N, C, H, W)


def cse_reference(x_nchw, w1, b1, w2, b2):
    # Pure-JAX reference matching the PyTorch module.
    w1f = jnp.asarray(w1, jnp.float32)
    b1f = jnp.asarray(b1, jnp.float32).reshape(1, -1)
    w2f = jnp.asarray(w2, jnp.float32)
    b2f = jnp.asarray(b2, jnp.float32).reshape(1, -1)
    mean = jnp.mean(x_nchw.astype(jnp.float32), axis=(2, 3))         # (N, C)
    h = jnp.clip(mean @ w1f.T + b1f, 0.0, 6.0)                       # (N, Cr)
    g = jax.nn.sigmoid(h @ w2f.T + b2f)                              # (N, C)
    return x_nchw * g[:, :, None, None].astype(x_nchw.dtype)


if __name__ == "__main__":
    # Module config: cSE(planes=4, r=0.5) -> hidden channels Cr = 2.
    N, C, H, W = 2, 4, 16, 16
    r = 0.5
    Cr = int(C * r)

    key = jax.random.PRNGKey(0)
    kx, k1, kb1, k2, kb2 = jax.random.split(key, 5)
    x = jax.random.normal(kx, (N, C, H, W), dtype=jnp.float32)

    # Deterministic synthetic parameters (1x1 Conv2d weights as matrices).
    w1 = jax.random.normal(k1, (Cr, C), dtype=jnp.float32) * 0.5     # squeeze conv weight
    b1 = jax.random.normal(kb1, (Cr,), dtype=jnp.float32) * 0.1      # squeeze conv bias
    w2 = jax.random.normal(k2, (C, Cr), dtype=jnp.float32) * 0.5     # expand conv weight
    b2 = jax.random.normal(kb2, (C,), dtype=jnp.float32) * 0.1       # expand conv bias

    out = cse_forward(x, w1, b1, w2, b2)
    jax.block_until_ready(out)

    ref = cse_reference(x, w1, b1, w2, b2)
    assert out.shape == (N, C, H, W)
    assert jnp.allclose(out, ref, atol=1e-5, rtol=1e-5), float(jnp.max(jnp.abs(out - ref)))

    print("KERNEL_OK")
</pallas_src>

<mosaic_0001>
module attributes {stable_mosaic.version = 11 : i64} {
  func.func @_cse_kernel(%arg0: i32, %arg1: memref<2x1024xf32, #tpu.memory_space<vmem>>, %arg2: memref<4x2xf32, #tpu.memory_space<vmem>>, %arg3: memref<1x2xf32, #tpu.memory_space<vmem>>, %arg4: memref<2x4xf32, #tpu.memory_space<vmem>>, %arg5: memref<1x4xf32, #tpu.memory_space<vmem>>, %arg6: memref<2x1024xf32, #tpu.memory_space<vmem>>) attributes {dimension_semantics = [#tpu.dimension_semantics<parallel>], iteration_bounds = array<i64: 1>, scalar_prefetch = 0 : i64, scratch_operands = 0 : i64, tpu.core_type = #tpu.core_type<tc>, window_params = [{transform_indices = @transform_0, window_bounds = array<i64: 2, 1024>}, {pipeline_mode = #tpu.pipeline_mode<synchronous>, transform_indices = @transform_1, window_bounds = array<i64: 4, 2>}, {pipeline_mode = #tpu.pipeline_mode<synchronous>, transform_indices = @transform_2, window_bounds = array<i64: 1, 2>}, {pipeline_mode = #tpu.pipeline_mode<synchronous>, transform_indices = @transform_3, window_bounds = array<i64: 2, 4>}, {pipeline_mode = #tpu.pipeline_mode<synchronous>, transform_indices = @transform_4, window_bounds = array<i64: 1, 4>}, {transform_indices = @transform_5, window_bounds = array<i64: 2, 1024>}]} {
    %c0 = arith.constant 0 : index
    %c0_0 = arith.constant 0 : index
    %0 = vector.load %arg2[%c0, %c0_0] : memref<4x2xf32, #tpu.memory_space<vmem>>, vector<4x2xf32>
    %c0_1 = arith.constant 0 : index
    %c0_2 = arith.constant 0 : index
    %1 = vector.load %arg3[%c0_1, %c0_2] : memref<1x2xf32, #tpu.memory_space<vmem>>, vector<1x2xf32>
    %c0_3 = arith.constant 0 : index
    %c0_4 = arith.constant 0 : index
    %2 = vector.load %arg4[%c0_3, %c0_4] : memref<2x4xf32, #tpu.memory_space<vmem>>, vector<2x4xf32>
    %c0_5 = arith.constant 0 : index
    %c0_6 = arith.constant 0 : index
    %3 = vector.load %arg5[%c0_5, %c0_6] : memref<1x4xf32, #tpu.memory_space<vmem>>, vector<1x4xf32>
    %c0_7 = arith.constant 0 : index
    %c0_8 = arith.constant 0 : index
    %4 = vector.load %arg1[%c0_7, %c0_8] : memref<2x1024xf32, #tpu.memory_space<vmem>>, vector<2x256xf32>
    %cst = arith.constant dense<0.000000e+00> : vector<2xf32>
    %5 = vector.multi_reduction <add>, %4, %cst [1] : vector<2x256xf32> to vector<2xf32>
    %6 = vector.shape_cast %5 : vector<2xf32> to vector<2x1xf32>
    %cst_9 = arith.constant 2.560000e+02 : f32
    %7 = vector.broadcast %cst_9 : f32 to vector<2x1xf32>
    %8 = arith.divf %6, %7 : vector<2x1xf32>
    %9 = vector.extract_strided_slice %0 {offsets = [0, 0], sizes = [1, 2], strides = [1, 1]} : vector<4x2xf32> to vector<1x2xf32>
    %10 = vector.broadcast %8 : vector<2x1xf32> to vector<2x2xf32>
    %11 = vector.broadcast %9 : vector<1x2xf32> to vector<2x2xf32>
    %12 = arith.mulf %10, %11 : vector<2x2xf32>
    %13 = vector.broadcast %1 : vector<1x2xf32> to vector<2x2xf32>
    %14 = arith.addf %13, %12 : vector<2x2xf32>
    %c0_10 = arith.constant 0 : index
    %c256 = arith.constant 256 : index
    %15 = vector.load %arg1[%c0_10, %c256] : memref<2x1024xf32, #tpu.memory_space<vmem>>, vector<2x256xf32>
    %cst_11 = arith.constant dense<0.000000e+00> : vector<2xf32>
    %16 = vector.multi_reduction <add>, %15, %cst_11 [1] : vector<2x256xf32> to vector<2xf32>
    %17 = vector.shape_cast %16 : vector<2xf32> to vector<2x1xf32>
    %cst_12 = arith.constant 2.560000e+02 : f32
    %18 = vector.broadcast %cst_12 : f32 to vector<2x1xf32>
    %19 = arith.divf %17, %18 : vector<2x1xf32>
    %20 = vector.extract_strided_slice %0 {offsets = [1, 0], sizes = [1, 2], strides = [1, 1]} : vector<4x2xf32> to vector<1x2xf32>
    %21 = vector.broadcast %19 : vector<2x1xf32> to vector<2x2xf32>
    %22 = vector.broadcast %20 : vector<1x2xf32> to vector<2x2xf32>
    %23 = arith.mulf %21, %22 : vector<2x2xf32>
    %24 = arith.addf %14, %23 : vector<2x2xf32>
    %c0_13 = arith.constant 0 : index
    %c512 = arith.constant 512 : index
    %25 = vector.load %arg1[%c0_13, %c512] : memref<2x1024xf32, #tpu.memory_space<vmem>>, vector<2x256xf32>
    %cst_14 = arith.constant dense<0.000000e+00> : vector<2xf32>
    %26 = vector.multi_reduction <add>, %25, %cst_14 [1] : vector<2x256xf32> to vector<2xf32>
    %27 = vector.shape_cast %26 : vector<2xf32> to vector<2x1xf32>
    %cst_15 = arith.constant 2.560000e+02 : f32
    %28 = vector.broadcast %cst_15 : f32 to vector<2x1xf32>
    %29 = arith.divf %27, %28 : vector<2x1xf32>
    %30 = vector.extract_strided_slice %0 {offsets = [2, 0], sizes = [1, 2], strides = [1, 1]} : vector<4x2xf32> to vector<1x2xf32>
    %31 = vector.broadcast %29 : vector<2x1xf32> to vector<2x2xf32>
    %32 = vector.broadcast %30 : vector<1x2xf32> to vector<2x2xf32>
    %33 = arith.mulf %31, %32 : vector<2x2xf32>
    %34 = arith.addf %24, %33 : vector<2x2xf32>
    %c0_16 = arith.constant 0 : index
    %c768 = arith.constant 768 : index
    %35 = vector.load %arg1[%c0_16, %c768] : memref<2x1024xf32, #tpu.memory_space<vmem>>, vector<2x256xf32>
    %cst_17 = arith.constant dense<0.000000e+00> : vector<2xf32>
    %36 = vector.multi_reduction <add>, %35, %cst_17 [1] : vector<2x256xf32> to vector<2xf32>
    %37 = vector.shape_cast %36 : vector<2xf32> to vector<2x1xf32>
    %cst_18 = arith.constant 2.560000e+02 : f32
    %38 = vector.broadcast %cst_18 : f32 to vector<2x1xf32>
    %39 = arith.divf %37, %38 : vector<2x1xf32>
    %40 = vector.extract_strided_slice %0 {offsets = [3, 0], sizes = [1, 2], strides = [1, 1]} : vector<4x2xf32> to vector<1x2xf32>
    %41 = vector.broadcast %39 : vector<2x1xf32> to vector<2x2xf32>
    %42 = vector.broadcast %40 : vector<1x2xf32> to vector<2x2xf32>
    %43 = arith.mulf %41, %42 : vector<2x2xf32>
    %44 = arith.addf %34, %43 : vector<2x2xf32>
    %cst_19 = arith.constant 0.000000e+00 : f32
    %cst_20 = arith.constant 6.000000e+00 : f32
    %45 = vector.broadcast %cst_19 : f32 to vector<2x2xf32>
    %46 = arith.maximumf %45, %44 : vector<2x2xf32>
    %47 = vector.broadcast %cst_20 : f32 to vector<2x2xf32>
    %48 = arith.minimumf %47, %46 : vector<2x2xf32>
    %49 = vector.extract_strided_slice %48 {offsets = [0, 0], sizes = [2, 1], strides = [1, 1]} : vector<2x2xf32> to vector<2x1xf32>
    %50 = vector.extract_strided_slice %2 {offsets = [0, 0], sizes = [1, 4], strides = [1, 1]} : vector<2x4xf32> to vector<1x4xf32>
    %51 = vector.broadcast %49 : vector<2x1xf32> to vector<2x4xf32>
    %52 = vector.broadcast %50 : vector<1x4xf32> to vector<2x4xf32>
    %53 = arith.mulf %51, %52 : vector<2x4xf32>
    %54 = vector.broadcast %3 : vector<1x4xf32> to vector<2x4xf32>
    %55 = arith.addf %54, %53 : vector<2x4xf32>
    %56 = vector.extract_strided_slice %48 {offsets = [0, 1], sizes = [2, 1], strides = [1, 1]} : vector<2x2xf32> to vector<2x1xf32>
    %57 = vector.extract_strided_slice %2 {offsets = [1, 0], sizes = [1, 4], strides = [1, 1]} : vector<2x4xf32> to vector<1x4xf32>
    %58 = vector.broadcast %56 : vector<2x1xf32> to vector<2x4xf32>
    %59 = vector.broadcast %57 : vector<1x4xf32> to vector<2x4xf32>
    %60 = arith.mulf %58, %59 : vector<2x4xf32>
    %61 = arith.addf %55, %60 : vector<2x4xf32>
    %62 = arith.negf %61 : vector<2x4xf32>
    %63 = math.exp %62 : vector<2x4xf32>
    %cst_21 = arith.constant 1.000000e+00 : f32
    %64 = vector.broadcast %cst_21 : f32 to vector<2x4xf32>
    %65 = arith.addf %64, %63 : vector<2x4xf32>
    %66 = arith.divf %64, %65 : vector<2x4xf32>
    %c0_22 = arith.constant 0 : index
    %c0_23 = arith.constant 0 : index
    %67 = vector.load %arg1[%c0_22, %c0_23] : memref<2x1024xf32, #tpu.memory_space<vmem>>, vector<2x256xf32>
    %68 = vector.extract_strided_slice %66 {offsets = [0, 0], sizes = [2, 1], strides = [1, 1]} : vector<2x4xf32> to vector<2x1xf32>
    %69 = vector.broadcast %68 : vector<2x1xf32> to vector<2x256xf32>
    %70 = arith.mulf %67, %69 : vector<2x256xf32>
    %c0_24 = arith.constant 0 : index
    %c0_25 = arith.constant 0 : index
    %71 = vector.load %arg6[%c0_24, %c0_25] : memref<2x1024xf32, #tpu.memory_space<vmem>>, vector<2x256xf32>
    tpu.vector_store %arg6[%c0_24, %c0_25], %70 {strides = array<i32>} : memref<2x1024xf32, #tpu.memory_space<vmem>>, vector<2x256xf32>,
    %c0_26 = arith.constant 0 : index
    %c256_27 = arith.constant 256 : index
    %72 = vector.load %arg1[%c0_26, %c256_27] : memref<2x1024xf32, #tpu.memory_space<vmem>>, vector<2x256xf32>
    %73 = vector.extract_strided_slice %66 {offsets = [0, 1], sizes = [2, 1], strides = [1, 1]} : vector<2x4xf32> to vector<2x1xf32>
    %74 = vector.broadcast %73 : vector<2x1xf32> to vector<2x256xf32>
    %75 = arith.mulf %72, %74 : vector<2x256xf32>
    %c0_28 = arith.constant 0 : index
    %c256_29 = arith.constant 256 : index
    %76 = vector.load %arg6[%c0_28, %c256_29] : memref<2x1024xf32, #tpu.memory_space<vmem>>, vector<2x256xf32>
    tpu.vector_store %arg6[%c0_28, %c256_29], %75 {strides = array<i32>} : memref<2x1024xf32, #tpu.memory_space<vmem>>, vector<2x256xf32>,
    %c0_30 = arith.constant 0 : index
    %c512_31 = arith.constant 512 : index
    %77 = vector.load %arg1[%c0_30, %c512_31] : memref<2x1024xf32, #tpu.memory_space<vmem>>, vector<2x256xf32>
    %78 = vector.extract_strided_slice %66 {offsets = [0, 2], sizes = [2, 1], strides = [1, 1]} : vector<2x4xf32> to vector<2x1xf32>
    %79 = vector.broadcast %78 : vector<2x1xf32> to vector<2x256xf32>
    %80 = arith.mulf %77, %79 : vector<2x256xf32>
    %c0_32 = arith.constant 0 : index
    %c512_33 = arith.constant 512 : index
    %81 = vector.load %arg6[%c0_32, %c512_33] : memref<2x1024xf32, #tpu.memory_space<vmem>>, vector<2x256xf32>
    tpu.vector_store %arg6[%c0_32, %c512_33], %80 {strides = array<i32>} : memref<2x1024xf32, #tpu.memory_space<vmem>>, vector<2x256xf32>,
    %c0_34 = arith.constant 0 : index
    %c768_35 = arith.constant 768 : index
    %82 = vector.load %arg1[%c0_34, %c768_35] : memref<2x1024xf32, #tpu.memory_space<vmem>>, vector<2x256xf32>
    %83 = vector.extract_strided_slice %66 {offsets = [0, 3], sizes = [2, 1], strides = [1, 1]} : vector<2x4xf32> to vector<2x1xf32>
    %84 = vector.broadcast %83 : vector<2x1xf32> to vector<2x256xf32>
    %85 = arith.mulf %82, %84 : vector<2x256xf32>
    %c0_36 = arith.constant 0 : index
    %c768_37 = arith.constant 768 : index
    %86 = vector.load %arg6[%c0_36, %c768_37] : memref<2x1024xf32, #tpu.memory_space<vmem>>, vector<2x256xf32>
    tpu.vector_store %arg6[%c0_36, %c768_37], %85 {strides = array<i32>} : memref<2x1024xf32, #tpu.memory_space<vmem>>, vector<2x256xf32>,
    return
  }
  func.func @transform_0(%arg0: i32) -> (i32, i32) {
    %c0_i32 = arith.constant 0 : i32
    %c0_i32_0 = arith.constant 0 : i32
    return %arg0, %c0_i32 : i32, i32
  }
  func.func @transform_1(%arg0: i32) -> (i32, i32) {
    %c0_i32 = arith.constant 0 : i32
    %c0_i32_0 = arith.constant 0 : i32
    %c0_i32_1 = arith.constant 0 : i32
    return %c0_i32, %c0_i32_0 : i32, i32
  }
  func.func @transform_2(%arg0: i32) -> (i32, i32) {
    %c0_i32 = arith.constant 0 : i32
    %c0_i32_0 = arith.constant 0 : i32
    %c0_i32_1 = arith.constant 0 : i32
    return %c0_i32, %c0_i32_0 : i32, i32
  }
  func.func @transform_3(%arg0: i32) -> (i32, i32) {
    %c0_i32 = arith.constant 0 : i32
    %c0_i32_0 = arith.constant 0 : i32
    %c0_i32_1 = arith.constant 0 : i32
    return %c0_i32, %c0_i32_0 : i32, i32
  }
  func.func @transform_4(%arg0: i32) -> (i32, i32) {
    %c0_i32 = arith.constant 0 : i32
    %c0_i32_0 = arith.constant 0 : i32
    %c0_i32_1 = arith.constant 0 : i32
    return %c0_i32, %c0_i32_0 : i32, i32
  }
  func.func @transform_5(%arg0: i32) -> (i32, i32) {
    %c0_i32 = arith.constant 0 : i32
    %c0_i32_0 = arith.constant 0 : i32
    return %arg0, %c0_i32 : i32, i32
  }
}

</mosaic_0001>

<llo_original>
// kernel: tpu_custom_call.1
$region0: #{tpu_custom_call.1}
  #allocation0 [shape = 'u32[]', space=smem, size = 0x4, offset = 0x4, fixed_abs, tag = 'smem constant byte address 0x4 - core index']
  #allocation1 [shape = 'u32[72,128]{1,0:T(1,128)}', space=vmem, size = 0x9000, scoped, tag = 'internal scratch']
  %s0 = inlined_call_operand.hbm [shape: f32[2,1024], index: 0, kind: input, shape index: {}]
  %s1 = inlined_call_operand.vmem [shape: f32[4,2], index: 1, kind: input, shape index: {}]
  %s2 = inlined_call_operand.vmem [shape: f32[1,2], index: 2, kind: input, shape index: {}]
  %s3 = inlined_call_operand.vmem [shape: f32[2,4], index: 3, kind: input, shape index: {}]
  %s4 = inlined_call_operand.vmem [shape: f32[1,4], index: 4, kind: input, shape index: {}]
  %s5 = inlined_call_operand.hbm [shape: f32[2,1024], index: 5, kind: output, shape index: {}]
  %s6 = sld [smem:[#allocation0]]
  $region34: #{tpu_custom_call.1} parent=0
    _
  %s8 = ssub.s32 1, %s6
  %s9 = scalar_select 0, %s8, %s6
  $region1: #{tpu_custom_call.1} parent=0
    #allocation2 [shape = 'u8[8192]{0}', space=vmem, size = 0x2000, scoped, tag = 'input window, operand 0, single buffered']
    #allocation3 [shape = 's32[1]{0}', space=sflag, size = 0x4, scoped, tag = 'scoped memory for tpu_custom_call.1']
    #allocation4 [shape = 's32[1]{0}', space=sflag, size = 0x4, scoped, tag = 'scoped memory for tpu_custom_call.1']
    #allocation5 [shape = 'u8[8192]{0}', space=vmem, size = 0x2000, scoped, tag = 'output window, operand 0, single buffered']
    %10 = vsyncpa [#allocation3], 0
    %11 = vsyncpa [#allocation4], 0
    // Predicated region
    $region2: #{tpu_custom_call.1} parent=1 // pred_check
      _
    $region3: #{tpu_custom_call.1} parent=1 // pred_check_branch
      %13 = sbr.rel (0) target = $region5
    $region4: #{tpu_custom_call.1} parent=1 // pred_region
      %15 = vsyncadd [#allocation3], 0
      %s17 = sshll.u32 %s0, 4
      %s18 = int_to_ptr.hbm [resolvable:$true] %s17
      %s19 = sshll.u32 [#allocation2], 4
      %s20 = int_to_ptr.vmem [resolvable:$true] %s19
      %22 = dma.hbm_to_vmem [thread:$0]  %s18, 256, %s20, [#allocation3]
    $region5: #{tpu_custom_call.1} parent=1 // pred_fallthru
      _
    // Predicated region
    $region6: #{tpu_custom_call.1} parent=1 // pred_check
      _
    $region7: #{tpu_custom_call.1} parent=1 // pred_check_branch
      %24 = sbr.rel (0) target = $region9
    $region8: #{tpu_custom_call.1} parent=1 // pred_region
      _
    $region9: #{tpu_custom_call.1} parent=1 // pred_fallthru
      _
    // Predicated region
    $region10: #{tpu_custom_call.1} parent=1 // pred_check
      _
    $region11: #{tpu_custom_call.1} parent=1 // pred_check_branch
      %26 = sbr.rel (0) target = $region13
    $region12: #{tpu_custom_call.1} parent=1 // pred_region
      _
    $region13: #{tpu_custom_call.1} parent=1 // pred_fallthru
      _
    // Predicated region
    $region14: #{tpu_custom_call.1} parent=1 // pred_check
      _
    $region15: #{tpu_custom_call.1} parent=1 // pred_check_branch
      %28 = sbr.rel (0) target = $region17
    $region16: #{tpu_custom_call.1} parent=1 // pred_region
      _
    $region17: #{tpu_custom_call.1} parent=1 // pred_fallthru
      _
    // Predicated region
    $region18: #{tpu_custom_call.1} parent=1 // pred_check
      _
    $region19: #{tpu_custom_call.1} parent=1 // pred_check_branch
      %30 = sbr.rel (0) target = $region21
    $region20: #{tpu_custom_call.1} parent=1 // pred_region
      _
    $region21: #{tpu_custom_call.1} parent=1 // pred_fallthru
      _
    // Predicated region
    $region22: #{tpu_custom_call.1} parent=1 // pred_check
      _
    $region23: #{tpu_custom_call.1} parent=1 // pred_check_branch
      %32 = sbr.rel (0) target = $region25
    $region24: #{tpu_custom_call.1} parent=1 // pred_region
      %34 = dma.done [#allocation3], 256
    $region25: #{tpu_custom_call.1} parent=1 // pred_fallthru
      _
    %v35 = vld [vmem:[%s1] sm:$0xf]
    %v36 = vld [vmem:[%s2] sm:$0x1]
    %v37 = vld [vmem:[%s3] sm:$0x3]
    %v38 = vld [vmem:[%s4] sm:$0x1]
    %v39 = vld [vmem:[#allocation2] sm:$0xf]
    %41 = vst [vmem:[#allocation1] ss:$4 sm:$0xff] %v39
    %v42 = vld.sshfl [vmem:[#allocation1] sm:$0xff pattern:$0x73625140]
    %v43 = vld.sshfl [vmem:[#allocation1 + $0x8] sm:$0xff pattern:$0x73625140]
    %vm46 = vcmask 1041408
    %v47 = vsel %vm46, %v42, 0.0
    %v48 = vsel %vm46, %v43, 0.0
    %v49 = vadd.f32 %v47, %v48
    %50 = vadd.xlane.f32.xlu0 %v49
    %v51 = vpop.xlane.xlu0 %50
    %v52 = vrcp.pop 256.0
    %v53 = vmul.f32 256.0, %v52
    %v54 = vsub.f32 1.0, %v53
    %v55 = vmul.f32 %v52, %v54
    %v56 = vadd.f32 %v52, %v55
    %vm57 = vweird.f32 %v52
    %v58 = vsel %vm57, %v52, %v56
    %v59 = vmul.f32 %v51, %v58
    %v60 = vperm.slane %v35, 0
    %v61 = vmul.f32 %v59, %v60
    %v63 = vperm.slane %v36, 0
    %v65 = vadd.f32 %v63, %v61
    %v66 = vld [vmem:[#allocation2 + $0x4] sm:$0xf]
    %68 = vst [vmem:[#allocation1] ss:$4 sm:$0xff] %v66
    %v69 = vld.sshfl [vmem:[#allocation1] sm:$0xff pattern:$0x73625140]
    %v70 = vld.sshfl [vmem:[#allocation1 + $0x8] sm:$0xff pattern:$0x73625140]
    %v73 = vsel %vm46, %v69, 0.0
    %v74 = vsel %vm46, %v70, 0.0
    %v75 = vadd.f32 %v73, %v74
    %76 = vadd.xlane.f32.xlu0 %v75
    %v77 = vpop.xlane.xlu0 %76
    %v78 = vmul.f32 %v77, %v58
    %v79 = vperm.slane %v35, 1
    %v80 = vmul.f32 %v78, %v79
    %v81 = vadd.f32 %v65, %v80
    %v82 = vld [vmem:[#allocation2 + $0x8] sm:$0xf]
    %84 = vst [vmem:[#allocation1] ss:$4 sm:$0xff] %v82
    %v85 = vld.sshfl [vmem:[#allocation1] sm:$0xff pattern:$0x73625140]
    %v86 = vld.sshfl [vmem:[#allocation1 + $0x8] sm:$0xff pattern:$0x73625140]
    %v89 = vsel %vm46, %v85, 0.0
    %v90 = vsel %vm46, %v86, 0.0
    %v91 = vadd.f32 %v89, %v90
    %92 = vadd.xlane.f32.xlu0 %v91
    %v93 = vpop.xlane.xlu0 %92
    %v94 = vmul.f32 %v93, %v58
    %v95 = vperm.slane %v35, 2
    %v96 = vmul.f32 %v94, %v95
    %v97 = vadd.f32 %v81, %v96
    %v98 = vld [vmem:[#allocation2 + $0xc] sm:$0xf]
    %100 = vst [vmem:[#allocation1] ss:$4 sm:$0xff] %v98
    %v101 = vld.sshfl [vmem:[#allocation1] sm:$0xff pattern:$0x73625140]
    %v102 = vld.sshfl [vmem:[#allocation1 + $0x8] sm:$0xff pattern:$0x73625140]
    %v105 = vsel %vm46, %v101, 0.0
    %v106 = vsel %vm46, %v102, 0.0
    %v107 = vadd.f32 %v105, %v106
    %108 = vadd.xlane.f32.xlu0 %v107
    %v109 = vpop.xlane.xlu0 %108
    %v110 = vmul.f32 %v109, %v58
    %v111 = vperm.slane %v35, 3
    %v112 = vmul.f32 %v110, %v111
    %v113 = vadd.f32 %v97, %v112
    %v114 = vmax.f32 %v113, 0.0
    %v115 = vmin.f32 %v114, 6.0
    %117 = vset.pattern.permute.xlu0 0
    %118 = vperm.xlu0 %117, %v115
    %v119 = vpop.permute.xlu0 %118
    %v121 = vperm.slane %v37, 0
    %v122 = vmul.f32 %v119, %v121
    %v124 = vperm.slane %v38, 0
    %v126 = vadd.f32 %v124, %v122
    %127 = vset.pattern.permute.xlu0 1
    %128 = vperm.xlu0 %127, %v115
    %v129 = vpop.permute.xlu0 %128
    %v131 = vperm.slane %v37, 1
    %v132 = vmul.f32 %v129, %v131
    %v133 = vadd.f32 %v126, %v132
    %v134 = vxor.u32 %v133, 2147483648
    %v135 = vmul.f32 %v134, 1.442695
    %v136 = vpow.pop %v135
    %v137 = vadd.f32 %v136, 1.0
    %v138 = vrcp.pop %v137
    %v139 = vmul.f32 %v137, %v138
    %v140 = vsub.f32 1.0, %v139
    %v141 = vmul.f32 %v138, %v140
    %v142 = vadd.f32 %v138, %v141
    %vm143 = vweird.f32 %v137
    %vm144 = vweird.f32 %v138
    %vm145 = vmor %vm143, %vm144
    %v146 = vsel %vm145, %v138, %v142
    %v147 = vand.u32 2147483647, %v137
    %vm148 = vcmp.eq.f32.partialorder %v147, 8.507059e+37
    %v149 = vand.u32 %v137, 2147483648
    %v150 = vor.u32 1.1754944e-38, %v149
    %v151 = vsel %vm148, %v150, %v146
    %v152 = vmul.f32 1.0, %v151
    %154 = vset.pattern.permute.xlu0 0
    %155 = vperm.xlu0 %154, %v152
    %v156 = vpop.permute.xlu0 %155
    %v158 = vunpack.c.l.s4 269488144
    %v159 = vunpack.c.0.s8 %v158
    %v160 = vperm.slane %v156, %v159
    %v162 = vmul.f32 %v39, %v160
    %163 = vst [vmem:[#allocation5] sm:$0xf] %v162
    %v164 = vld [vmem:[#allocation2 + $0x4] sm:$0xf]
    %165 = vset.pattern.permute.xlu0 1
    %166 = vperm.xlu0 %165, %v152
    %v167 = vpop.permute.xlu0 %166
    %v169 = vunpack.c.l.s4 269488144
    %v170 = vunpack.c.0.s8 %v169
    %v171 = vperm.slane %v167, %v170
    %v173 = vmul.f32 %v164, %v171
    %174 = vst [vmem:[#allocation5 + $0x4] sm:$0xf] %v173
    %v175 = vld [vmem:[#allocation2 + $0x8] sm:$0xf]
    %176 = vset.pattern.permute.xlu0 2
    %177 = vperm.xlu0 %176, %v152
    %v178 = vpop.permute.xlu0 %177
    %v180 = vunpack.c.l.s4 269488144
    %v181 = vunpack.c.0.s8 %v180
    %v182 = vperm.slane %v178, %v181
    %v184 = vmul.f32 %v175, %v182
    %185 = vst [vmem:[#allocation5 + $0x8] sm:$0xf] %v184
    %v186 = vld [vmem:[#allocation2 + $0xc] sm:$0xf]
    %187 = vset.pattern.permute.xlu0 3
    %188 = vperm.xlu0 %187, %v152
    %v189 = vpop.permute.xlu0 %188
    %v191 = vunpack.c.l.s4 269488144
    %v192 = vunpack.c.0.s8 %v191
    %v193 = vperm.slane %v189, %v192
    %v195 = vmul.f32 %v186, %v193
    %196 = vst [vmem:[#allocation5 + $0xc] sm:$0xf] %v195
    // Predicated region
    $region26: #{tpu_custom_call.1} parent=1 // pred_check
      _
    $region27: #{tpu_custom_call.1} parent=1 // pred_check_branch
      %198 = sbr.rel (0) target = $region29
    $region28: #{tpu_custom_call.1} parent=1 // pred_region
      %200 = vsyncadd [#allocation4], 0
      %s202 = sshll.u32 [#allocation5], 4
      %s203 = int_to_ptr.vmem [resolvable:$true] %s202
      %s204 = sshll.u32 %s5, 4
      %s205 = int_to_ptr.hbm [resolvable:$true] %s204
      %207 = dma.vmem_to_hbm [thread:$0]  %s203, 256, %s205, [#allocation4]
    $region29: #{tpu_custom_call.1} parent=1 // pred_fallthru
      _
    // Predicated region
    $region30: #{tpu_custom_call.1} parent=1 // pred_check
      _
    $region31: #{tpu_custom_call.1} parent=1 // pred_check_branch
      %209 = sbr.rel (0) target = $region33
    $region32: #{tpu_custom_call.1} parent=1 // pred_region
      %211 = dma.done [#allocation4], 256
    $region33: #{tpu_custom_call.1} parent=1 // pred_fallthru
      _
    %212 = vsyncpa [#allocation3], 1
    %213 = vsyncpa [#allocation4], 1

</llo_original>
